<compile_context>
chip_gen: v5e
topology: v5e:2x2
jax: 0.10.0
libtpu: 0.0.40
codegen_flags: <defaults>
</compile_context>

<pallas_src>
import jax
import jax.numpy as jnp
from jax.experimental import pallas as pl
from jax.experimental.pallas import tpu as pltpu

LANES = 128  # lane-dense padding target for every layer's in/out dims


def _mlp_kernel(x_ref, w_ref, b_ref, out_ref):
    # x: (B, 16) f32 — already f32, no cast needed.
    x = x_ref[...]

    # fc1 + ReLU : (B,16) @ (16,128)   (only cols 0:64 are "real", rest zero)
    h = jnp.dot(x, w_ref[0:16, :], preferred_element_type=jnp.float32) + b_ref[0:1, :]
    h = jnp.maximum(h, 0.0)

    # fc2 + ReLU : (B,128) @ (128,128) (zero-padded K rows contribute exactly 0)
    h = jnp.dot(h, w_ref[128:256, :], preferred_element_type=jnp.float32) + b_ref[1:2, :]
    h = jnp.maximum(h, 0.0)

    # fc3 + ReLU : (B,128) @ (128,128)
    h = jnp.dot(h, w_ref[256:384, :], preferred_element_type=jnp.float32) + b_ref[2:3, :]
    h = jnp.maximum(h, 0.0)

    # fc4 : (B,128) @ (128,128)  -> logits in cols 0:5, zeros elsewhere
    logits = jnp.dot(h, w_ref[384:512, :], preferred_element_type=jnp.float32) + b_ref[3:4, :]

    # Softmax over axis 0 (batch axis), matching nn.Softmax(0).
    m = jnp.max(logits, axis=0, keepdims=True)
    e = jnp.exp(logits - m)
    denom = jnp.sum(e, axis=0, keepdims=True)
    out_ref[...] = (e * pl.reciprocal(denom, approx=False)).astype(out_ref.dtype)


def pack_params(params):
    """Pack PyTorch-layout (out,in) weights into one lane-dense slab.

    Returns:
      w_slab: (4*LANES, LANES) f32 — layer l occupies rows [128*l : 128*(l+1)],
              holding w_l.T zero-padded to (128, 128) in (in, out) layout.
      b_slab: (4, LANES) f32 — row l holds bias_l zero-padded to 128 lanes.
      n_out:  true output width of the last layer (5).
    """
    w_blocks, b_rows = [], []
    for w, b in params:
        wt = w.T  # (in, out)
        k, n = wt.shape
        w_blocks.append(jnp.zeros((LANES, LANES), jnp.float32).at[:k, :n].set(wt))
        b_rows.append(jnp.zeros((LANES,), jnp.float32).at[:n].set(b))
    w_slab = jnp.concatenate(w_blocks, axis=0)  # (512, 128)
    b_slab = jnp.stack(b_rows, axis=0)          # (4, 128)
    n_out = params[-1][0].shape[0]
    return w_slab, b_slab, n_out


def three_layer_model_pallas(x, w_slab, b_slab, n_out):
    B = x.shape[0]
    vmem = pl.BlockSpec(memory_space=pltpu.MemorySpace.VMEM)
    out_full = pl.pallas_call(
        _mlp_kernel,
        out_shape=jax.ShapeDtypeStruct((B, LANES), jnp.float32),
        in_specs=[vmem, vmem, vmem],
        out_specs=vmem,
    )(x, w_slab, b_slab)
    # Lane-dense kernel output; keep only the real 5 classes.
    return out_full[:, :n_out]


def init_params(key):
    """Deterministic synthetic parameters with PyTorch Linear shapes."""
    sizes = [(64, 16), (32, 64), (32, 32), (5, 32)]
    params = []
    for i, (out_f, in_f) in enumerate(sizes):
        kw, kb = jax.random.split(jax.random.fold_in(key, i))
        bound = 1.0 / jnp.sqrt(in_f)
        w = jax.random.uniform(kw, (out_f, in_f), jnp.float32, -bound, bound)
        b = jax.random.uniform(kb, (out_f,), jnp.float32, -bound, bound)
        params.append((w, b))
    return params


def reference_forward(x, params):
    """Pure-JAX reference of the PyTorch forward pass."""
    (w1, b1), (w2, b2), (w3, b3), (w4, b4) = params
    h = jnp.maximum(x @ w1.T + b1, 0.0)
    h = jnp.maximum(h @ w2.T + b2, 0.0)
    h = jnp.maximum(h @ w3.T + b3, 0.0)
    logits = h @ w4.T + b4
    return jax.nn.softmax(logits, axis=0)


if __name__ == "__main__":
    key = jax.random.PRNGKey(0)
    k_x, k_p = jax.random.split(key)

    B = 8  # small batch; input feature dim fixed at 16 by the module
    x = jax.random.normal(k_x, (B, 16), jnp.float32)
    params = init_params(k_p)

    # Pack parameters once (layout plumbing lives outside the kernel).
    w_slab, b_slab, n_out = pack_params(params)

    out = three_layer_model_pallas(x, w_slab, b_slab, n_out)
    out = jax.block_until_ready(out)

    ref = reference_forward(x, params)
    assert out.shape == (B, n_out)
    assert jnp.allclose(out, ref, atol=1e-5, rtol=1e-5)

    print("KERNEL_OK")
</pallas_src>

<mosaic_0001>
module attributes {stable_mosaic.version = 11 : i64} {
  func.func @_mlp_kernel(%arg0: memref<8x16xf32, #tpu.memory_space<vmem>>, %arg1: memref<512x128xf32, #tpu.memory_space<vmem>>, %arg2: memref<4x128xf32, #tpu.memory_space<vmem>>, %arg3: memref<8x128xf32, #tpu.memory_space<vmem>>) attributes {dimension_semantics = [], scalar_prefetch = 0 : i64, scratch_operands = 0 : i64, tpu.core_type = #tpu.core_type<tc>} {
    %c0 = arith.constant 0 : index
    %c0_0 = arith.constant 0 : index
    %0 = vector.load %arg0[%c0, %c0_0] : memref<8x16xf32, #tpu.memory_space<vmem>>, vector<8x16xf32>
    %c0_1 = arith.constant 0 : index
    %c0_2 = arith.constant 0 : index
    %1 = vector.load %arg1[%c0_1, %c0_2] : memref<512x128xf32, #tpu.memory_space<vmem>>, vector<16x128xf32>
    %cst = arith.constant dense<0.000000e+00> : vector<8x128xf32>
    %2 = tpu.matmul %0, %1, %cst {dimension_numbers = #tpu.dot_dimension_numbers<[1], [0], [0], [1], [0, 0, 1, 1], [], []>} : vector<8x16xf32>, vector<16x128xf32>, vector<8x128xf32> -> vector<8x128xf32>
    %c0_3 = arith.constant 0 : index
    %c0_4 = arith.constant 0 : index
    %3 = vector.load %arg2[%c0_3, %c0_4] : memref<4x128xf32, #tpu.memory_space<vmem>>, vector<1x128xf32>
    %4 = vector.broadcast %3 : vector<1x128xf32> to vector<8x128xf32>
    %5 = arith.addf %2, %4 : vector<8x128xf32>
    %cst_5 = arith.constant 0.000000e+00 : f32
    %6 = vector.broadcast %cst_5 : f32 to vector<8x128xf32>
    %7 = arith.maximumf %5, %6 : vector<8x128xf32>
    %c128 = arith.constant 128 : index
    %c0_6 = arith.constant 0 : index
    %8 = vector.load %arg1[%c128, %c0_6] : memref<512x128xf32, #tpu.memory_space<vmem>>, vector<128x128xf32>
    %cst_7 = arith.constant dense<0.000000e+00> : vector<8x128xf32>
    %9 = tpu.matmul %7, %8, %cst_7 {dimension_numbers = #tpu.dot_dimension_numbers<[1], [0], [0], [1], [0, 0, 1, 1], [], []>} : vector<8x128xf32>, vector<128x128xf32>, vector<8x128xf32> -> vector<8x128xf32>
    %c1 = arith.constant 1 : index
    %c0_8 = arith.constant 0 : index
    %10 = vector.load %arg2[%c1, %c0_8] : memref<4x128xf32, #tpu.memory_space<vmem>>, vector<1x128xf32>
    %11 = vector.broadcast %10 : vector<1x128xf32> to vector<8x128xf32>
    %12 = arith.addf %9, %11 : vector<8x128xf32>
    %cst_9 = arith.constant 0.000000e+00 : f32
    %13 = vector.broadcast %cst_9 : f32 to vector<8x128xf32>
    %14 = arith.maximumf %12, %13 : vector<8x128xf32>
    %c256 = arith.constant 256 : index
    %c0_10 = arith.constant 0 : index
    %15 = vector.load %arg1[%c256, %c0_10] : memref<512x128xf32, #tpu.memory_space<vmem>>, vector<128x128xf32>
    %cst_11 = arith.constant dense<0.000000e+00> : vector<8x128xf32>
    %16 = tpu.matmul %14, %15, %cst_11 {dimension_numbers = #tpu.dot_dimension_numbers<[1], [0], [0], [1], [0, 0, 1, 1], [], []>} : vector<8x128xf32>, vector<128x128xf32>, vector<8x128xf32> -> vector<8x128xf32>
    %c2 = arith.constant 2 : index
    %c0_12 = arith.constant 0 : index
    %17 = vector.load %arg2[%c2, %c0_12] : memref<4x128xf32, #tpu.memory_space<vmem>>, vector<1x128xf32>
    %18 = vector.broadcast %17 : vector<1x128xf32> to vector<8x128xf32>
    %19 = arith.addf %16, %18 : vector<8x128xf32>
    %cst_13 = arith.constant 0.000000e+00 : f32
    %20 = vector.broadcast %cst_13 : f32 to vector<8x128xf32>
    %21 = arith.maximumf %19, %20 : vector<8x128xf32>
    %c384 = arith.constant 384 : index
    %c0_14 = arith.constant 0 : index
    %22 = vector.load %arg1[%c384, %c0_14] : memref<512x128xf32, #tpu.memory_space<vmem>>, vector<128x128xf32>
    %cst_15 = arith.constant dense<0.000000e+00> : vector<8x128xf32>
    %23 = tpu.matmul %21, %22, %cst_15 {dimension_numbers = #tpu.dot_dimension_numbers<[1], [0], [0], [1], [0, 0, 1, 1], [], []>} : vector<8x128xf32>, vector<128x128xf32>, vector<8x128xf32> -> vector<8x128xf32>
    %c3 = arith.constant 3 : index
    %c0_16 = arith.constant 0 : index
    %24 = vector.load %arg2[%c3, %c0_16] : memref<4x128xf32, #tpu.memory_space<vmem>>, vector<1x128xf32>
    %25 = vector.broadcast %24 : vector<1x128xf32> to vector<8x128xf32>
    %26 = arith.addf %23, %25 : vector<8x128xf32>
    %cst_17 = arith.constant dense<0xFF800000> : vector<128xf32>
    %27 = vector.multi_reduction <maximumf>, %26, %cst_17 [0] : vector<8x128xf32> to vector<128xf32>
    %28 = vector.shape_cast %27 : vector<128xf32> to vector<1x128xf32>
    %29 = vector.broadcast %28 : vector<1x128xf32> to vector<8x128xf32>
    %30 = arith.subf %26, %29 : vector<8x128xf32>
    %31 = math.exp %30 : vector<8x128xf32>
    %cst_18 = arith.constant dense<0.000000e+00> : vector<128xf32>
    %32 = vector.multi_reduction <add>, %31, %cst_18 [0] : vector<8x128xf32> to vector<128xf32>
    %33 = vector.shape_cast %32 : vector<128xf32> to vector<1x128xf32>
    %34 = tpu.reciprocal %33 : vector<1x128xf32> -> vector<1x128xf32>
    %35 = vector.broadcast %34 : vector<1x128xf32> to vector<8x128xf32>
    %36 = arith.mulf %31, %35 : vector<8x128xf32>
    %c0_19 = arith.constant 0 : index
    %c0_20 = arith.constant 0 : index
    %37 = vector.load %arg3[%c0_19, %c0_20] : memref<8x128xf32, #tpu.memory_space<vmem>>, vector<8x128xf32>
    tpu.vector_store %arg3[%c0_19, %c0_20], %36 {strides = array<i32>} : memref<8x128xf32, #tpu.memory_space<vmem>>, vector<8x128xf32>,
    return
  }
}

</mosaic_0001>

<llo_original>
// kernel: tpu_custom_call.1
$region0: #{tpu_custom_call.1}
  #allocation0 [shape = 'u32[]', space=smem, size = 0x4, offset = 0x4, fixed_abs, tag = 'smem constant byte address 0x4 - core index']
  #allocation1 [shape = 'u32[72,128]{1,0:T(1,128)}', space=vmem, size = 0x9000, scoped, tag = 'internal scratch']
  %s0 = inlined_call_operand.hbm [shape: f32[8,16], index: 0, kind: input, shape index: {}]
  %s1 = inlined_call_operand.hbm [shape: f32[512,128], index: 1, kind: input, shape index: {}]
  %s2 = inlined_call_operand.hbm [shape: f32[4,128], index: 2, kind: input, shape index: {}]
  %s3 = inlined_call_operand.hbm [shape: f32[8,128], index: 3, kind: output, shape index: {}]
  %s4 = sld [smem:[#allocation0]]
  $region34: #{tpu_custom_call.1} parent=0
    _
  %s6 = ssub.s32 1, %s4
  %s7 = scalar_select 0, %s6, %s4
  $region1: #{tpu_custom_call.1} parent=0
    #allocation2 [shape = 'u8[4096]{0}', space=vmem, size = 0x1000, scoped, tag = 'input window, operand 0, single buffered']
    #allocation3 [shape = 's32[1]{0}', space=sflag, size = 0x4, scoped, tag = 'scoped memory for tpu_custom_call.1']
    #allocation4 [shape = 's32[1]{0}', space=sflag, size = 0x4, scoped, tag = 'scoped memory for tpu_custom_call.1']
    #allocation5 [shape = 'u8[262144]{0}', space=vmem, size = 0x40000, scoped, tag = 'input window, operand 1, single buffered']
    #allocation6 [shape = 's32[1]{0}', space=sflag, size = 0x4, scoped, tag = 'scoped memory for tpu_custom_call.1']
    #allocation7 [shape = 'u8[2048]{0}', space=vmem, size = 0x800, scoped, tag = 'input window, operand 2, single buffered']
    #allocation8 [shape = 'u8[4096]{0}', space=vmem, size = 0x1000, scoped, tag = 'output window, operand 0, single buffered']
    %8 = vsyncpa [#allocation3], 0
    %9 = vsyncpa [#allocation6], 0
    %10 = vsyncpa [#allocation4], 0
    // Predicated region
    $region2: #{tpu_custom_call.1} parent=1 // pred_check
      _
    $region3: #{tpu_custom_call.1} parent=1 // pred_check_branch
      %12 = sbr.rel (0) target = $region5
    $region4: #{tpu_custom_call.1} parent=1 // pred_region
      %14 = vsyncadd [#allocation3], 0
      %s16 = sshll.u32 %s0, 4
      %s17 = int_to_ptr.hbm [resolvable:$true] %s16
      %s18 = sshll.u32 [#allocation2], 4
      %s19 = int_to_ptr.vmem [resolvable:$true] %s18
      %21 = dma.hbm_to_vmem [thread:$0]  %s17, 128, %s19, [#allocation3]
    $region5: #{tpu_custom_call.1} parent=1 // pred_fallthru
      _
    // Predicated region
    $region6: #{tpu_custom_call.1} parent=1 // pred_check
      _
    $region7: #{tpu_custom_call.1} parent=1 // pred_check_branch
      %23 = sbr.rel (0) target = $region9
    $region8: #{tpu_custom_call.1} parent=1 // pred_region
      %25 = vsyncadd [#allocation6], 0
      %s26 = sshll.u32 %s1, 4
      %s27 = int_to_ptr.hbm [resolvable:$true] %s26
      %s28 = sshll.u32 [#allocation5], 4
      %s29 = int_to_ptr.vmem [resolvable:$true] %s28
      %34 = dma.hbm_to_vmem [thread:$0]  %s27, 8192, %s29, [#allocation6], 128, 128, 8
    $region9: #{tpu_custom_call.1} parent=1 // pred_fallthru
      _
    // Predicated region
    $region10: #{tpu_custom_call.1} parent=1 // pred_check
      _
    $region11: #{tpu_custom_call.1} parent=1 // pred_check_branch
      %36 = sbr.rel (0) target = $region13
    $region12: #{tpu_custom_call.1} parent=1 // pred_region
      %38 = vsyncadd [#allocation6], 0
      %s40 = sshll.u32 %s2, 4
      %s41 = int_to_ptr.hbm [resolvable:$true] %s40
      %s42 = sshll.u32 [#allocation7], 4
      %s43 = int_to_ptr.vmem [resolvable:$true] %s42
      %45 = dma.hbm_to_vmem [thread:$0]  %s41, 64, %s43, [#allocation6]
    $region13: #{tpu_custom_call.1} parent=1 // pred_fallthru
      _
    // Predicated region
    $region14: #{tpu_custom_call.1} parent=1 // pred_check
      _
    $region15: #{tpu_custom_call.1} parent=1 // pred_check_branch
      %47 = sbr.rel (0) target = $region17
    $region16: #{tpu_custom_call.1} parent=1 // pred_region
      %49 = dma.done [#allocation3], 128
    $region17: #{tpu_custom_call.1} parent=1 // pred_fallthru
      _
    // Predicated region
    $region18: #{tpu_custom_call.1} parent=1 // pred_check
      _
    $region19: #{tpu_custom_call.1} parent=1 // pred_check_branch
      %51 = sbr.rel (0) target = $region21
    $region20: #{tpu_custom_call.1} parent=1 // pred_region
      %53 = dma.done [#allocation6], 8192
    $region21: #{tpu_custom_call.1} parent=1 // pred_fallthru
      _
    // Predicated region
    $region22: #{tpu_custom_call.1} parent=1 // pred_check
      _
    $region23: #{tpu_custom_call.1} parent=1 // pred_check_branch
      %55 = sbr.rel (0) target = $region25
    $region24: #{tpu_custom_call.1} parent=1 // pred_region
      %57 = dma.done [#allocation6], 64
    $region25: #{tpu_custom_call.1} parent=1 // pred_fallthru
      _
    %v58 = vld [vmem:[#allocation2] sm:$0xff]
    %v59 = vld [vmem:[#allocation5] sm:$0xff]
    %v60 = vld [vmem:[#allocation5 + $0x8] sm:$0xff]
    %v61 = vld [vmem:[#allocation7] sm:$0x1]
    %v62 = vperm.slane %v61, 0
    %vm63 = vcmask 130048
    %v65 = vsel %vm63, %v58, 0
    %67 = vmatpush.msra.mxu0 0.0
    %68 = vmatpush.msra.mxu0 0.0
    %69 = vmatpush.msra.mxu0 0.0
    %70 = vmatpush.msra.mxu0 0.0
    %71 = vmatpush.msra.mxu0 0.0
    %72 = vmatpush.msra.mxu0 0.0
    %73 = vmatpush.msra.mxu0 0.0
    %74 = vmatpush.msra.mxu0 0.0
    %75 = vmatpush.msra.mxu0 0.0
    %76 = vmatpush.msra.mxu0 0.0
    %77 = vmatpush.msra.mxu0 0.0
    %78 = vmatpush.msra.mxu0 0.0
    %79 = vmatpush.msra.mxu0 0.0
    %80 = vmatpush.msra.mxu0 0.0
    %81 = vmatpush.msra.mxu0 %v60
    %82 = vmatpush.msra.mxu0 %v59
    %83 = vmatmul.f32.gmra.mxu0 %v65
    %v84 = vpop.f32.mrf.mxu0
    %v85 = vadd.f32 %v62, %v84
    %86 = vdwg.mxu0
    %v87 = vmax.f32 %v85, 0.0
    %v88 = vld [vmem:[#allocation5 + $0x80] sm:$0xff]
    %v89 = vld [vmem:[#allocation5 + $0x88] sm:$0xff]
    %v90 = vld [vmem:[#allocation5 + $0x90] sm:$0xff]
    %v91 = vld [vmem:[#allocation5 + $0x98] sm:$0xff]
    %v92 = vld [vmem:[#allocation5 + $0xa0] sm:$0xff]
    %v93 = vld [vmem:[#allocation5 + $0xa8] sm:$0xff]
    %v94 = vld [vmem:[#allocation5 + $0xb0] sm:$0xff]
    %v95 = vld [vmem:[#allocation5 + $0xb8] sm:$0xff]
    %v96 = vld [vmem:[#allocation5 + $0xc0] sm:$0xff]
    %v97 = vld [vmem:[#allocation5 + $0xc8] sm:$0xff]
    %v98 = vld [vmem:[#allocation5 + $0xd0] sm:$0xff]
    %v99 = vld [vmem:[#allocation5 + $0xd8] sm:$0xff]
    %v100 = vld [vmem:[#allocation5 + $0xe0] sm:$0xff]
    %v101 = vld [vmem:[#allocation5 + $0xe8] sm:$0xff]
    %v102 = vld [vmem:[#allocation5 + $0xf0] sm:$0xff]
    %v103 = vld [vmem:[#allocation5 + $0xf8] sm:$0xff]
    %v104 = vld [vmem:[#allocation7 + $0x1] sm:$0x1]
    %v105 = vperm.slane %v104, 0
    %106 = vmatpush.msra.mxu0 %v103
    %107 = vmatpush.msra.mxu0 %v102
    %108 = vmatpush.msra.mxu0 %v101
    %109 = vmatpush.msra.mxu0 %v100
    %110 = vmatpush.msra.mxu0 %v99
    %111 = vmatpush.msra.mxu0 %v98
    %112 = vmatpush.msra.mxu0 %v97
    %113 = vmatpush.msra.mxu0 %v96
    %114 = vmatpush.msra.mxu0 %v95
    %115 = vmatpush.msra.mxu0 %v94
    %116 = vmatpush.msra.mxu0 %v93
    %117 = vmatpush.msra.mxu0 %v92
    %118 = vmatpush.msra.mxu0 %v91
    %119 = vmatpush.msra.mxu0 %v90
    %120 = vmatpush.msra.mxu0 %v89
    %121 = vmatpush.msra.mxu0 %v88
    %122 = vmatmul.f32.gmra.mxu0 %v87
    %v123 = vpop.f32.mrf.mxu0
    %v124 = vadd.f32 %v105, %v123
    %125 = vdwg.mxu0
    %v126 = vmax.f32 %v124, 0.0
    %v127 = vld [vmem:[#allocation5 + $0x100] sm:$0xff]
    %v128 = vld [vmem:[#allocation5 + $0x108] sm:$0xff]
    %v129 = vld [vmem:[#allocation5 + $0x110] sm:$0xff]
    %v130 = vld [vmem:[#allocation5 + $0x118] sm:$0xff]
    %v131 = vld [vmem:[#allocation5 + $0x120] sm:$0xff]
    %v132 = vld [vmem:[#allocation5 + $0x128] sm:$0xff]
    %v133 = vld [vmem:[#allocation5 + $0x130] sm:$0xff]
    %v134 = vld [vmem:[#allocation5 + $0x138] sm:$0xff]
    %v135 = vld [vmem:[#allocation5 + $0x140] sm:$0xff]
    %v136 = vld [vmem:[#allocation5 + $0x148] sm:$0xff]
    %v137 = vld [vmem:[#allocation5 + $0x150] sm:$0xff]
    %v138 = vld [vmem:[#allocation5 + $0x158] sm:$0xff]
    %v139 = vld [vmem:[#allocation5 + $0x160] sm:$0xff]
    %v140 = vld [vmem:[#allocation5 + $0x168] sm:$0xff]
    %v141 = vld [vmem:[#allocation5 + $0x170] sm:$0xff]
    %v142 = vld [vmem:[#allocation5 + $0x178] sm:$0xff]
    %v143 = vld [vmem:[#allocation7 + $0x2] sm:$0x1]
    %v144 = vperm.slane %v143, 0
    %145 = vmatpush.msra.mxu0 %v142
    %146 = vmatpush.msra.mxu0 %v141
    %147 = vmatpush.msra.mxu0 %v140
    %148 = vmatpush.msra.mxu0 %v139
    %149 = vmatpush.msra.mxu0 %v138
    %150 = vmatpush.msra.mxu0 %v137
    %151 = vmatpush.msra.mxu0 %v136
    %152 = vmatpush.msra.mxu0 %v135
    %153 = vmatpush.msra.mxu0 %v134
    %154 = vmatpush.msra.mxu0 %v133
    %155 = vmatpush.msra.mxu0 %v132
    %156 = vmatpush.msra.mxu0 %v131
    %157 = vmatpush.msra.mxu0 %v130
    %158 = vmatpush.msra.mxu0 %v129
    %159 = vmatpush.msra.mxu0 %v128
    %160 = vmatpush.msra.mxu0 %v127
    %161 = vmatmul.f32.gmra.mxu0 %v126
    %v162 = vpop.f32.mrf.mxu0
    %v163 = vadd.f32 %v144, %v162
    %164 = vdwg.mxu0
    %v165 = vmax.f32 %v163, 0.0
    %v166 = vld [vmem:[#allocation5 + $0x180] sm:$0xff]
    %v167 = vld [vmem:[#allocation5 + $0x188] sm:$0xff]
    %v168 = vld [vmem:[#allocation5 + $0x190] sm:$0xff]
    %v169 = vld [vmem:[#allocation5 + $0x198] sm:$0xff]
    %v170 = vld [vmem:[#allocation5 + $0x1a0] sm:$0xff]
    %v171 = vld [vmem:[#allocation5 + $0x1a8] sm:$0xff]
    %v172 = vld [vmem:[#allocation5 + $0x1b0] sm:$0xff]
    %v173 = vld [vmem:[#allocation5 + $0x1b8] sm:$0xff]
    %v174 = vld [vmem:[#allocation5 + $0x1c0] sm:$0xff]
    %v175 = vld [vmem:[#allocation5 + $0x1c8] sm:$0xff]
    %v176 = vld [vmem:[#allocation5 + $0x1d0] sm:$0xff]
    %v177 = vld [vmem:[#allocation5 + $0x1d8] sm:$0xff]
    %v178 = vld [vmem:[#allocation5 + $0x1e0] sm:$0xff]
    %v179 = vld [vmem:[#allocation5 + $0x1e8] sm:$0xff]
    %v180 = vld [vmem:[#allocation5 + $0x1f0] sm:$0xff]
    %v181 = vld [vmem:[#allocation5 + $0x1f8] sm:$0xff]
    %v182 = vld [vmem:[#allocation7 + $0x3] sm:$0x1]
    %v183 = vperm.slane %v182, 0
    %184 = vmatpush.msra.mxu0 %v181
    %185 = vmatpush.msra.mxu0 %v180
    %186 = vmatpush.msra.mxu0 %v179
    %187 = vmatpush.msra.mxu0 %v178
    %188 = vmatpush.msra.mxu0 %v177
    %189 = vmatpush.msra.mxu0 %v176
    %190 = vmatpush.msra.mxu0 %v175
    %191 = vmatpush.msra.mxu0 %v174
    %192 = vmatpush.msra.mxu0 %v173
    %193 = vmatpush.msra.mxu0 %v172
    %194 = vmatpush.msra.mxu0 %v171
    %195 = vmatpush.msra.mxu0 %v170
    %196 = vmatpush.msra.mxu0 %v169
    %197 = vmatpush.msra.mxu0 %v168
    %198 = vmatpush.msra.mxu0 %v167
    %199 = vmatpush.msra.mxu0 %v166
    %200 = vmatmul.f32.gmra.mxu0 %v165
    %v201 = vpop.f32.mrf.mxu0
    %v202 = vadd.f32 %v183, %v201
    %203 = vdwg.mxu0
    %v204 = vrot.slane %v202, 4
    %v205 = vmax.f32 %v202, %v204
    %v206 = vrot.slane %v205, 2
    %v207 = vmax.f32 %v205, %v206
    %v208 = vrot.slane %v207, 1
    %v209 = vmax.f32 %v207, %v208
    %v210 = vsub.f32 %v202, %v209
    %v211 = vmul.f32 %v210, 1.442695
    %v212 = vpow.pop %v211
    %v213 = vrot.slane %v212, 4
    %v214 = vadd.f32 %v212, %v213
    %v215 = vrot.slane %v214, 2
    %v216 = vadd.f32 %v214, %v215
    %v217 = vrot.slane %v216, 1
    %v218 = vadd.f32 %v216, %v217
    %v219 = vrcp.pop %v218
    %v220 = vmul.f32 %v218, %v219
    %v221 = vsub.f32 1.0, %v220
    %v222 = vmul.f32 %v219, %v221
    %v223 = vadd.f32 %v219, %v222
    %vm224 = vweird.f32 %v218
    %vm225 = vweird.f32 %v219
    %vm226 = vmor %vm224, %vm225
    %v227 = vsel %vm226, %v219, %v223
    %v228 = vand.u32 2147483647, %v218
    %vm229 = vcmp.eq.f32.partialorder %v228, 8.507059e+37
    %v230 = vand.u32 %v218, 2147483648
    %v231 = vor.u32 1.1754944e-38, %v230
    %v232 = vsel %vm229, %v231, %v227
    %v233 = vmul.f32 %v212, %v232
    %234 = vst [vmem:[#allocation8] sm:$0xff] %v233
    // Predicated region
    $region26: #{tpu_custom_call.1} parent=1 // pred_check
      _
    $region27: #{tpu_custom_call.1} parent=1 // pred_check_branch
      %236 = sbr.rel (0) target = $region29
    $region28: #{tpu_custom_call.1} parent=1 // pred_region
      %238 = vsyncadd [#allocation4], 0
      %s240 = sshll.u32 [#allocation8], 4
      %s241 = int_to_ptr.vmem [resolvable:$true] %s240
      %s242 = sshll.u32 %s3, 4
      %s243 = int_to_ptr.hbm [resolvable:$true] %s242
      %245 = dma.vmem_to_hbm [thread:$0]  %s241, 128, %s243, [#allocation4]
    $region29: #{tpu_custom_call.1} parent=1 // pred_fallthru
      _
    // Predicated region
    $region30: #{tpu_custom_call.1} parent=1 // pred_check
      _
    $region31: #{tpu_custom_call.1} parent=1 // pred_check_branch
      %247 = sbr.rel (0) target = $region33
    $region32: #{tpu_custom_call.1} parent=1 // pred_region
      %249 = dma.done [#allocation4], 128
    $region33: #{tpu_custom_call.1} parent=1 // pred_fallthru
      _
    %250 = vsyncpa [#allocation3], 1
    %251 = vsyncpa [#allocation6], 1
    %252 = vsyncpa [#allocation4], 1

</llo_original>
